<compile_context>
chip_gen: v7x
topology: tpu7x:2x2x1
jax: 0.10.0
libtpu: 0.0.40
codegen_flags: <defaults>
</compile_context>

<pallas_src>
import functools
from typing import NamedTuple

import jax
import jax.numpy as jnp
from jax.experimental import pallas as pl
from jax.experimental.pallas import tpu as pltpu

_LANE = 128
_SUBLANE = 8


def _round_up(n, m):
    return ((n + m - 1) // m) * m


# ---------------------------------------------------------------------------
# One-time parameter preparation (lane padding + optional bf16 weight storage).
# ---------------------------------------------------------------------------
class PreparedParams(NamedTuple):
    w1: jax.Array   # [c_in,     hidden_p]  (matmul dtype)
    b1: jax.Array   # [1,        hidden_p]  (f32)
    w2: jax.Array   # [hidden_p, out_p]
    b2: jax.Array   # [1,        out_p]
    w3: jax.Array   # [out_p,    n_cls_p]
    b3: jax.Array   # [1,        n_cls_p]
    hidden: int
    out_channel: int
    n_cls: int


def prepare_params(params, *, matmul_dtype=None):
    """Zero-pad hidden / out_channel / n_cls up to multiples of 128 and
    optionally store the weight matrices in `matmul_dtype` (e.g. bf16).
    The padding is numerically exact (zero rows/cols through matmul, ReLU(0)=0)
    and is done once here, not per forward call."""
    w1, b1, w2, b2, w3, b3 = params
    hidden = w1.shape[1]
    out_channel = w2.shape[1]
    n_cls = w3.shape[1]

    hidden_p = _round_up(hidden, _LANE)
    out_p = _round_up(out_channel, _LANE)
    n_cls_p = _round_up(n_cls, _LANE)

    def wcast(w):
        return w if matmul_dtype is None else w.astype(matmul_dtype)

    w1p = wcast(jnp.pad(w1, ((0, 0), (0, hidden_p - hidden))))
    b1p = jnp.pad(b1, ((0, 0), (0, hidden_p - hidden)))
    w2p = wcast(jnp.pad(w2, ((0, hidden_p - hidden), (0, out_p - out_channel))))
    b2p = jnp.pad(b2, ((0, 0), (0, out_p - out_channel)))
    w3p = wcast(jnp.pad(w3, ((0, out_p - out_channel), (0, n_cls_p - n_cls))))
    b3p = jnp.pad(b3, ((0, 0), (0, n_cls_p - n_cls)))
    return PreparedParams(w1p, b1p, w2p, b2p, w3p, b3p, hidden, out_channel, n_cls)


# ---------------------------------------------------------------------------
# Kernel
# ---------------------------------------------------------------------------
def _mlp_embedding_kernel(x_ref, w1_ref, b1_ref, w2_ref, b2_ref, w3_ref, b3_ref,
                          feat_ref, logits_ref, *, matmul_dtype):
    def _mm(a, w_ref):
        # Weights are already stored in matmul_dtype; only the activation is
        # cast (in-kernel, overlapped), f32 accumulation on the MXU.
        if matmul_dtype is not None:
            a = a.astype(matmul_dtype)
        return jnp.dot(a, w_ref[...], preferred_element_type=jnp.float32)

    x = x_ref[...]

    # Linear(in_channel, in_channel//2) + ReLU       (f32 bias add / elementwise)
    h = jnp.maximum(_mm(x, w1_ref) + b1_ref[...], 0.0)

    # Linear(in_channel//2, out_channel) + ReLU  -> feat
    feat = jnp.maximum(_mm(h, w2_ref) + b2_ref[...], 0.0)
    feat_ref[...] = feat.astype(feat_ref.dtype)

    # classifier: Linear(out_channel, n_cls)
    logits = _mm(feat, w3_ref) + b3_ref[...]
    logits_ref[...] = logits.astype(logits_ref.dtype)


# ---------------------------------------------------------------------------
# Tiling / hardware heuristics
# ---------------------------------------------------------------------------
def _tpu_defaults():
    vmem_cap = 128 * 1024 * 1024
    try:
        vmem_cap = int(pltpu.get_tpu_info().vmem_capacity_bytes)
    except Exception:
        pass
    # v7x-class (<= 64 MiB VMEM, 2 TCs): smaller batch tile; v5e/v6e: bigger.
    tile_b_max = 256 if vmem_cap <= 64 * 1024 * 1024 else 512
    return tile_b_max, vmem_cap


def _choose_tile_b(B, tile_b_max):
    n_tiles = max(1, pl.cdiv(B, tile_b_max))
    # Keep >= 2 real tiles (and an even grid) when the batch is big enough so
    # both v7x TensorCores get non-padding work under dimension_semantics
    # ("parallel",).  Harmless (~0.35 us/step) on single-TC v5e/v6e.
    if n_tiles < 2 and B >= 2 * _SUBLANE:
        n_tiles = 2
    if n_tiles > 1 and n_tiles % 2 == 1:
        n_tiles += 1
    tile_b = _round_up(pl.cdiv(B, n_tiles), _SUBLANE)
    b_pad = _round_up(B, tile_b)
    return tile_b, b_pad


# ---------------------------------------------------------------------------
# Forward wrapper
# ---------------------------------------------------------------------------
def mlp_embedding_forward(x, prepared: PreparedParams, *, out_dtype=None):
    """x: [B, in_channel].  Returns (feat [B, out_channel], logits [B, n_cls])."""
    w1p, b1p, w2p, b2p, w3p, b3p = prepared[:6]
    out_channel, n_cls = prepared.out_channel, prepared.n_cls
    B, c_in = x.shape
    hidden_p, out_p, n_cls_p = w1p.shape[1], w2p.shape[1], w3p.shape[1]
    out_dtype = x.dtype if out_dtype is None else out_dtype

    # Matmul dtype is whatever the prepared weights are stored in.
    matmul_dtype = w1p.dtype if w1p.dtype != jnp.dtype(x.dtype) else None

    # --- Balanced batch tiling ------------------------------------------------
    tile_b_max, vmem_cap = _tpu_defaults()
    tile_b, b_pad = _choose_tile_b(B, tile_b_max)
    if b_pad != B:
        x = jnp.pad(x, ((0, b_pad - B), (0, 0)))
    grid = (b_pad // tile_b,)

    # --- VMEM budget derived from the actual footprint -------------------------
    xb = jnp.dtype(x.dtype).itemsize
    ob = jnp.dtype(out_dtype).itemsize
    weight_bytes = sum(int(p.size) * jnp.dtype(p.dtype).itemsize
                       for p in (w1p, b1p, w2p, b2p, w3p, b3p))
    footprint = (2 * tile_b * c_in * xb            # double-buffered x tiles
                 + 2 * tile_b * out_p * ob         # double-buffered feat tiles
                 + 2 * tile_b * n_cls_p * ob       # double-buffered logits tiles
                 + weight_bytes                    # single-buffered weights
                 + tile_b * (hidden_p + out_p + n_cls_p) * 4)  # f32 intermediates
    vmem_limit = min(max(int(footprint * 1.5) + (4 << 20), 16 << 20),
                     int(vmem_cap * 0.9))

    cost = pl.CostEstimate(
        flops=2 * b_pad * (c_in * hidden_p + hidden_p * out_p + out_p * n_cls_p),
        transcendentals=0,
        bytes_accessed=(b_pad * c_in * xb
                        + b_pad * (out_p + n_cls_p) * ob
                        + weight_bytes),
    )

    kernel = functools.partial(_mlp_embedding_kernel, matmul_dtype=matmul_dtype)

    def run(weight_buffers):
        def resident(shape):
            # Same block every grid step -> stays resident in VMEM; single
            # buffer halves the weight VMEM footprint.
            kw = {}
            if weight_buffers is not None:
                kw["pipeline_mode"] = pl.Buffered(weight_buffers)
            return pl.BlockSpec(shape, lambda i: (0, 0), **kw)

        return pl.pallas_call(
            kernel,
            grid=grid,
            in_specs=[
                pl.BlockSpec((tile_b, c_in), lambda i: (i, 0)),   # x: batch-tiled
                resident(w1p.shape), resident(b1p.shape),
                resident(w2p.shape), resident(b2p.shape),
                resident(w3p.shape), resident(b3p.shape),
            ],
            out_specs=(
                pl.BlockSpec((tile_b, out_p), lambda i: (i, 0)),     # feat
                pl.BlockSpec((tile_b, n_cls_p), lambda i: (i, 0)),   # logits (lane-dense)
            ),
            out_shape=(
                jax.ShapeDtypeStruct((b_pad, out_p), out_dtype),
                jax.ShapeDtypeStruct((b_pad, n_cls_p), out_dtype),
            ),
            compiler_params=pltpu.CompilerParams(
                dimension_semantics=("parallel",),   # shard batch grid across TCs
                vmem_limit_bytes=vmem_limit,
            ),
            cost_estimate=cost,
        )(x, w1p, b1p, w2p, b2p, w3p, b3p)

    try:
        feat_p, logits_p = run(1)         # single-buffer resident weights/biases
    except Exception:
        feat_p, logits_p = run(None)      # fallback: default pipeline buffering

    return feat_p[:B, :out_channel], logits_p[:B, :n_cls]


# ---------------------------------------------------------------------------
# Init + pure-JAX reference
# ---------------------------------------------------------------------------
def init_params(key, in_channel, n_cls, out_channel=128, dtype=jnp.float32):
    """PyTorch-Linear-style uniform(-1/sqrt(fan_in), 1/sqrt(fan_in)) init.
    Weights are [fan_in, fan_out]; biases are [1, fan_out]."""
    hidden = in_channel // 2
    dims = [(in_channel, hidden), (hidden, out_channel), (out_channel, n_cls)]
    params = []
    for fan_in, fan_out in dims:
        key, kw, kb = jax.random.split(key, 3)
        bound = 1.0 / jnp.sqrt(jnp.float32(fan_in))
        w = jax.random.uniform(kw, (fan_in, fan_out), dtype, -bound, bound)
        b = jax.random.uniform(kb, (1, fan_out), dtype, -bound, bound)
        params += [w, b]
    return tuple(params)


def reference_forward(x, params):
    w1, b1, w2, b2, w3, b3 = params
    h = jax.nn.relu(x @ w1 + b1)
    feat = jax.nn.relu(h @ w2 + b2)
    logits = feat @ w3 + b3
    return feat, logits


if __name__ == "__main__":
    key = jax.random.PRNGKey(0)
    k_x, k_p, k_x2 = jax.random.split(key, 3)

    batch = 8
    in_channel = 64
    n_cls = 10
    out_channel = 128

    x = jax.random.normal(k_x, (batch, in_channel), jnp.float32)
    params = init_params(k_p, in_channel, n_cls, out_channel)
    prep_f32 = prepare_params(params)                             # exact path
    prep_bf16 = prepare_params(params, matmul_dtype=jnp.bfloat16)  # bf16 weights

    # Small batch, f32 path.
    feat, logits = mlp_embedding_forward(x, prep_f32)
    jax.block_until_ready((feat, logits))
    feat_ref, logits_ref = reference_forward(x, params)
    assert feat.shape == (batch, out_channel)
    assert logits.shape == (batch, n_cls)
    assert jnp.allclose(feat, feat_ref, atol=1e-4, rtol=1e-4)
    assert jnp.allclose(logits, logits_ref, atol=1e-4, rtol=1e-4)

    # Larger batch: balanced tiling (600 -> 608 padded rows, not 1024) and a
    # >=2-step even "parallel" grid for v7x's two TensorCores.
    x2 = jax.random.normal(k_x2, (600, in_channel), jnp.float32)
    feat2, logits2 = mlp_embedding_forward(x2, prep_f32)
    jax.block_until_ready((feat2, logits2))
    feat2_ref, logits2_ref = reference_forward(x2, params)
    assert feat2.shape == (600, out_channel)
    assert logits2.shape == (600, n_cls)
    assert jnp.allclose(feat2, feat2_ref, atol=1e-4, rtol=1e-4)
    assert jnp.allclose(logits2, logits2_ref, atol=1e-4, rtol=1e-4)

    # bf16-resident weights (f32 accumulation, f32 bias+ReLU): loose tolerance.
    feat3, logits3 = mlp_embedding_forward(x, prep_bf16)
    jax.block_until_ready((feat3, logits3))
    assert jnp.allclose(feat3, feat_ref, atol=2e-1, rtol=5e-2)
    assert jnp.allclose(logits3, logits_ref, atol=2e-1, rtol=5e-2)

    print("KERNEL_OK")
</pallas_src>

<mosaic_0001>
module attributes {stable_mosaic.version = 11 : i64} {
  func.func @_mlp_embedding_kernel(%arg0: i32, %arg1: memref<8x64xf32, #tpu.memory_space<vmem>>, %arg2: memref<64x128xf32, #tpu.memory_space<vmem>>, %arg3: memref<1x128xf32, #tpu.memory_space<vmem>>, %arg4: memref<128x128xf32, #tpu.memory_space<vmem>>, %arg5: memref<1x128xf32, #tpu.memory_space<vmem>>, %arg6: memref<128x128xf32, #tpu.memory_space<vmem>>, %arg7: memref<1x128xf32, #tpu.memory_space<vmem>>, %arg8: memref<8x128xf32, #tpu.memory_space<vmem>>, %arg9: memref<8x128xf32, #tpu.memory_space<vmem>>) attributes {dimension_semantics = [#tpu.dimension_semantics<parallel>], iteration_bounds = array<i64: 1>, scalar_prefetch = 0 : i64, scratch_operands = 0 : i64, tpu.core_type = #tpu.core_type<tc>, window_params = [{transform_indices = @transform_0, window_bounds = array<i64: 8, 64>}, {pipeline_mode = #tpu.pipeline_mode<synchronous>, transform_indices = @transform_1, window_bounds = array<i64: 64, 128>}, {pipeline_mode = #tpu.pipeline_mode<synchronous>, transform_indices = @transform_2, window_bounds = array<i64: 1, 128>}, {pipeline_mode = #tpu.pipeline_mode<synchronous>, transform_indices = @transform_3, window_bounds = array<i64: 128, 128>}, {pipeline_mode = #tpu.pipeline_mode<synchronous>, transform_indices = @transform_4, window_bounds = array<i64: 1, 128>}, {pipeline_mode = #tpu.pipeline_mode<synchronous>, transform_indices = @transform_5, window_bounds = array<i64: 128, 128>}, {pipeline_mode = #tpu.pipeline_mode<synchronous>, transform_indices = @transform_6, window_bounds = array<i64: 1, 128>}, {transform_indices = @transform_7, window_bounds = array<i64: 8, 128>}, {transform_indices = @transform_8, window_bounds = array<i64: 8, 128>}]} {
    %c0 = arith.constant 0 : index
    %c0_0 = arith.constant 0 : index
    %0 = vector.load %arg1[%c0, %c0_0] : memref<8x64xf32, #tpu.memory_space<vmem>>, vector<8x64xf32>
    %c0_1 = arith.constant 0 : index
    %c0_2 = arith.constant 0 : index
    %1 = vector.load %arg2[%c0_1, %c0_2] : memref<64x128xf32, #tpu.memory_space<vmem>>, vector<64x128xf32>
    %cst = arith.constant dense<0.000000e+00> : vector<8x128xf32>
    %2 = tpu.matmul %0, %1, %cst {dimension_numbers = #tpu.dot_dimension_numbers<[1], [0], [0], [1], [0, 0, 1, 1], [], []>} : vector<8x64xf32>, vector<64x128xf32>, vector<8x128xf32> -> vector<8x128xf32>
    %c0_3 = arith.constant 0 : index
    %c0_4 = arith.constant 0 : index
    %3 = vector.load %arg3[%c0_3, %c0_4] : memref<1x128xf32, #tpu.memory_space<vmem>>, vector<1x128xf32>
    %4 = vector.broadcast %3 : vector<1x128xf32> to vector<8x128xf32>
    %5 = arith.addf %2, %4 : vector<8x128xf32>
    %cst_5 = arith.constant 0.000000e+00 : f32
    %6 = vector.broadcast %cst_5 : f32 to vector<8x128xf32>
    %7 = arith.maximumf %5, %6 : vector<8x128xf32>
    %c0_6 = arith.constant 0 : index
    %c0_7 = arith.constant 0 : index
    %8 = vector.load %arg4[%c0_6, %c0_7] : memref<128x128xf32, #tpu.memory_space<vmem>>, vector<128x128xf32>
    %cst_8 = arith.constant dense<0.000000e+00> : vector<8x128xf32>
    %9 = tpu.matmul %7, %8, %cst_8 {dimension_numbers = #tpu.dot_dimension_numbers<[1], [0], [0], [1], [0, 0, 1, 1], [], []>} : vector<8x128xf32>, vector<128x128xf32>, vector<8x128xf32> -> vector<8x128xf32>
    %c0_9 = arith.constant 0 : index
    %c0_10 = arith.constant 0 : index
    %10 = vector.load %arg5[%c0_9, %c0_10] : memref<1x128xf32, #tpu.memory_space<vmem>>, vector<1x128xf32>
    %11 = vector.broadcast %10 : vector<1x128xf32> to vector<8x128xf32>
    %12 = arith.addf %9, %11 : vector<8x128xf32>
    %cst_11 = arith.constant 0.000000e+00 : f32
    %13 = vector.broadcast %cst_11 : f32 to vector<8x128xf32>
    %14 = arith.maximumf %12, %13 : vector<8x128xf32>
    %c0_12 = arith.constant 0 : index
    %c0_13 = arith.constant 0 : index
    %15 = vector.load %arg8[%c0_12, %c0_13] : memref<8x128xf32, #tpu.memory_space<vmem>>, vector<8x128xf32>
    tpu.vector_store %arg8[%c0_12, %c0_13], %14 {strides = array<i32>} : memref<8x128xf32, #tpu.memory_space<vmem>>, vector<8x128xf32>,
    %c0_14 = arith.constant 0 : index
    %c0_15 = arith.constant 0 : index
    %16 = vector.load %arg6[%c0_14, %c0_15] : memref<128x128xf32, #tpu.memory_space<vmem>>, vector<128x128xf32>
    %cst_16 = arith.constant dense<0.000000e+00> : vector<8x128xf32>
    %17 = tpu.matmul %14, %16, %cst_16 {dimension_numbers = #tpu.dot_dimension_numbers<[1], [0], [0], [1], [0, 0, 1, 1], [], []>} : vector<8x128xf32>, vector<128x128xf32>, vector<8x128xf32> -> vector<8x128xf32>
    %c0_17 = arith.constant 0 : index
    %c0_18 = arith.constant 0 : index
    %18 = vector.load %arg7[%c0_17, %c0_18] : memref<1x128xf32, #tpu.memory_space<vmem>>, vector<1x128xf32>
    %19 = vector.broadcast %18 : vector<1x128xf32> to vector<8x128xf32>
    %20 = arith.addf %17, %19 : vector<8x128xf32>
    %c0_19 = arith.constant 0 : index
    %c0_20 = arith.constant 0 : index
    %21 = vector.load %arg9[%c0_19, %c0_20] : memref<8x128xf32, #tpu.memory_space<vmem>>, vector<8x128xf32>
    tpu.vector_store %arg9[%c0_19, %c0_20], %20 {strides = array<i32>} : memref<8x128xf32, #tpu.memory_space<vmem>>, vector<8x128xf32>,
    return
  }
  func.func @transform_0(%arg0: i32) -> (i32, i32) {
    %c0_i32 = arith.constant 0 : i32
    %c0_i32_0 = arith.constant 0 : i32
    return %arg0, %c0_i32 : i32, i32
  }
  func.func @transform_1(%arg0: i32) -> (i32, i32) {
    %c0_i32 = arith.constant 0 : i32
    %c0_i32_0 = arith.constant 0 : i32
    %c0_i32_1 = arith.constant 0 : i32
    return %c0_i32, %c0_i32_0 : i32, i32
  }
  func.func @transform_2(%arg0: i32) -> (i32, i32) {
    %c0_i32 = arith.constant 0 : i32
    %c0_i32_0 = arith.constant 0 : i32
    %c0_i32_1 = arith.constant 0 : i32
    return %c0_i32, %c0_i32_0 : i32, i32
  }
  func.func @transform_3(%arg0: i32) -> (i32, i32) {
    %c0_i32 = arith.constant 0 : i32
    %c0_i32_0 = arith.constant 0 : i32
    %c0_i32_1 = arith.constant 0 : i32
    return %c0_i32, %c0_i32_0 : i32, i32
  }
  func.func @transform_4(%arg0: i32) -> (i32, i32) {
    %c0_i32 = arith.constant 0 : i32
    %c0_i32_0 = arith.constant 0 : i32
    %c0_i32_1 = arith.constant 0 : i32
    return %c0_i32, %c0_i32_0 : i32, i32
  }
  func.func @transform_5(%arg0: i32) -> (i32, i32) {
    %c0_i32 = arith.constant 0 : i32
    %c0_i32_0 = arith.constant 0 : i32
    %c0_i32_1 = arith.constant 0 : i32
    return %c0_i32, %c0_i32_0 : i32, i32
  }
  func.func @transform_6(%arg0: i32) -> (i32, i32) {
    %c0_i32 = arith.constant 0 : i32
    %c0_i32_0 = arith.constant 0 : i32
    %c0_i32_1 = arith.constant 0 : i32
    return %c0_i32, %c0_i32_0 : i32, i32
  }
  func.func @transform_7(%arg0: i32) -> (i32, i32) {
    %c0_i32 = arith.constant 0 : i32
    %c0_i32_0 = arith.constant 0 : i32
    return %arg0, %c0_i32 : i32, i32
  }
  func.func @transform_8(%arg0: i32) -> (i32, i32) {
    %c0_i32 = arith.constant 0 : i32
    %c0_i32_0 = arith.constant 0 : i32
    return %arg0, %c0_i32 : i32, i32
  }
}

module attributes {stable_mosaic.version = 11 : i64} {
  func.func @_mlp_embedding_kernel(%arg0: i32, %arg1: memref<8x64xf32, #tpu.memory_space<vmem>>, %arg2: memref<64x128xf32, #tpu.memory_space<vmem>>, %arg3: memref<1x128xf32, #tpu.memory_space<vmem>>, %arg4: memref<128x128xf32, #tpu.memory_space<vmem>>, %arg5: memref<1x128xf32, #tpu.memory_space<vmem>>, %arg6: memref<128x128xf32, #tpu.memory_space<vmem>>, %arg7: memref<1x128xf32, #tpu.memory_space<vmem>>, %arg8: memref<8x128xf32, #tpu.memory_space<vmem>>, %arg9: memref<8x128xf32, #tpu.memory_space<vmem>>) attributes {dimension_semantics = [#tpu.dimension_semantics<parallel>], iteration_bounds = array<i64: 1>, scalar_prefetch = 0 : i64, scratch_operands = 0 : i64, tpu.core_type = #tpu.core_type<tc>, window_params = [{transform_indices = @transform_0, window_bounds = array<i64: 8, 64>}, {pipeline_mode = #tpu.pipeline_mode<synchronous>, transform_indices = @transform_1, window_bounds = array<i64: 64, 128>}, {pipeline_mode = #tpu.pipeline_mode<synchronous>, transform_indices = @transform_2, window_bounds = array<i64: 1, 128>}, {pipeline_mode = #tpu.pipeline_mode<synchronous>, transform_indices = @transform_3, window_bounds = array<i64: 128, 128>}, {pipeline_mode = #tpu.pipeline_mode<synchronous>, transform_indices = @transform_4, window_bounds = array<i64: 1, 128>}, {pipeline_mode = #tpu.pipeline_mode<synchronous>, transform_indices = @transform_5, window_bounds = array<i64: 128, 128>}, {pipeline_mode = #tpu.pipeline_mode<synchronous>, transform_indices = @transform_6, window_bounds = array<i64: 1, 128>}, {transform_indices = @transform_7, window_bounds = array<i64: 8, 128>}, {transform_indices = @transform_8, window_bounds = array<i64: 8, 128>}]} {
    %c0 = arith.constant 0 : index
    %c0_0 = arith.constant 0 : index
    %0 = vector.load %arg1[%c0, %c0_0] : memref<8x64xf32, #tpu.memory_space<vmem>>, vector<8x64xf32>
    %c0_1 = arith.constant 0 : index
    %c0_2 = arith.constant 0 : index
    %1 = vector.load %arg2[%c0_1, %c0_2] : memref<64x128xf32, #tpu.memory_space<vmem>>, vector<64x128xf32>
    %cst = arith.constant dense<0.000000e+00> : vector<8x128xf32>
    %2 = tpu.matmul %0, %1, %cst {dimension_numbers = #tpu.dot_dimension_numbers<[1], [0], [0], [1], [0, 0, 1, 1], [], []>} : vector<8x64xf32>, vector<64x128xf32>, vector<8x128xf32> -> vector<8x128xf32>
    %c0_3 = arith.constant 0 : index
    %c0_4 = arith.constant 0 : index
    %3 = vector.load %arg3[%c0_3, %c0_4] : memref<1x128xf32, #tpu.memory_space<vmem>>, vector<1x128xf32>
    %4 = vector.broadcast %3 : vector<1x128xf32> to vector<8x128xf32>
    %5 = arith.addf %2, %4 : vector<8x128xf32>
    %cst_5 = arith.constant 0.000000e+00 : f32
    %6 = vector.broadcast %cst_5 : f32 to vector<8x128xf32>
    %7 = arith.maximumf %5, %6 : vector<8x128xf32>
    %c0_6 = arith.constant 0 : index
    %c0_7 = arith.constant 0 : index
    %8 = vector.load %arg4[%c0_6, %c0_7] : memref<128x128xf32, #tpu.memory_space<vmem>>, vector<128x128xf32>
    %cst_8 = arith.constant dense<0.000000e+00> : vector<8x128xf32>
    %9 = tpu.matmul %7, %8, %cst_8 {dimension_numbers = #tpu.dot_dimension_numbers<[1], [0], [0], [1], [0, 0, 1, 1], [], []>} : vector<8x128xf32>, vector<128x128xf32>, vector<8x128xf32> -> vector<8x128xf32>
    %c0_9 = arith.constant 0 : index
    %c0_10 = arith.constant 0 : index
    %10 = vector.load %arg5[%c0_9, %c0_10] : memref<1x128xf32, #tpu.memory_space<vmem>>, vector<1x128xf32>
    %11 = vector.broadcast %10 : vector<1x128xf32> to vector<8x128xf32>
    %12 = arith.addf %9, %11 : vector<8x128xf32>
    %cst_11 = arith.constant 0.000000e+00 : f32
    %13 = vector.broadcast %cst_11 : f32 to vector<8x128xf32>
    %14 = arith.maximumf %12, %13 : vector<8x128xf32>
    %c0_12 = arith.constant 0 : index
    %c0_13 = arith.constant 0 : index
    %15 = vector.load %arg8[%c0_12, %c0_13] : memref<8x128xf32, #tpu.memory_space<vmem>>, vector<8x128xf32>
    tpu.vector_store %arg8[%c0_12, %c0_13], %14 {strides = array<i32>} : memref<8x128xf32, #tpu.memory_space<vmem>>, vector<8x128xf32>,
    %c0_14 = arith.constant 0 : index
    %c0_15 = arith.constant 0 : index
    %16 = vector.load %arg6[%c0_14, %c0_15] : memref<128x128xf32, #tpu.memory_space<vmem>>, vector<128x128xf32>
    %cst_16 = arith.constant dense<0.000000e+00> : vector<8x128xf32>
    %17 = tpu.matmul %14, %16, %cst_16 {dimension_numbers = #tpu.dot_dimension_numbers<[1], [0], [0], [1], [0, 0, 1, 1], [], []>} : vector<8x128xf32>, vector<128x128xf32>, vector<8x128xf32> -> vector<8x128xf32>
    %c0_17 = arith.constant 0 : index
    %c0_18 = arith.constant 0 : index
    %18 = vector.load %arg7[%c0_17, %c0_18] : memref<1x128xf32, #tpu.memory_space<vmem>>, vector<1x128xf32>
    %19 = vector.broadcast %18 : vector<1x128xf32> to vector<8x128xf32>
    %20 = arith.addf %17, %19 : vector<8x128xf32>
    %c0_19 = arith.constant 0 : index
    %c0_20 = arith.constant 0 : index
    %21 = vector.load %arg9[%c0_19, %c0_20] : memref<8x128xf32, #tpu.memory_space<vmem>>, vector<8x128xf32>
    tpu.vector_store %arg9[%c0_19, %c0_20], %20 {strides = array<i32>} : memref<8x128xf32, #tpu.memory_space<vmem>>, vector<8x128xf32>,
    return
  }
  func.func @transform_0(%arg0: i32) -> (i32, i32) {
    %c0_i32 = arith.constant 0 : i32
    %c0_i32_0 = arith.constant 0 : i32
    return %arg0, %c0_i32 : i32, i32
  }
  func.func @transform_1(%arg0: i32) -> (i32, i32) {
    %c0_i32 = arith.constant 0 : i32
    %c0_i32_0 = arith.constant 0 : i32
    %c0_i32_1 = arith.constant 0 : i32
    return %c0_i32, %c0_i32_0 : i32, i32
  }
  func.func @transform_2(%arg0: i32) -> (i32, i32) {
    %c0_i32 = arith.constant 0 : i32
    %c0_i32_0 = arith.constant 0 : i32
    %c0_i32_1 = arith.constant 0 : i32
    return %c0_i32, %c0_i32_0 : i32, i32
  }
  func.func @transform_3(%arg0: i32) -> (i32, i32) {
    %c0_i32 = arith.constant 0 : i32
    %c0_i32_0 = arith.constant 0 : i32
    %c0_i32_1 = arith.constant 0 : i32
    return %c0_i32, %c0_i32_0 : i32, i32
  }
  func.func @transform_4(%arg0: i32) -> (i32, i32) {
    %c0_i32 = arith.constant 0 : i32
    %c0_i32_0 = arith.constant 0 : i32
    %c0_i32_1 = arith.constant 0 : i32
    return %c0_i32, %c0_i32_0 : i32, i32
  }
  func.func @transform_5(%arg0: i32) -> (i32, i32) {
    %c0_i32 = arith.constant 0 : i32
    %c0_i32_0 = arith.constant 0 : i32
    %c0_i32_1 = arith.constant 0 : i32
    return %c0_i32, %c0_i32_0 : i32, i32
  }
  func.func @transform_6(%arg0: i32) -> (i32, i32) {
    %c0_i32 = arith.constant 0 : i32
    %c0_i32_0 = arith.constant 0 : i32
    %c0_i32_1 = arith.constant 0 : i32
    return %c0_i32, %c0_i32_0 : i32, i32
  }
  func.func @transform_7(%arg0: i32) -> (i32, i32) {
    %c0_i32 = arith.constant 0 : i32
    %c0_i32_0 = arith.constant 0 : i32
    return %arg0, %c0_i32 : i32, i32
  }
  func.func @transform_8(%arg0: i32) -> (i32, i32) {
    %c0_i32 = arith.constant 0 : i32
    %c0_i32_0 = arith.constant 0 : i32
    return %arg0, %c0_i32 : i32, i32
  }
}

</mosaic_0001>

<llo_original>
// kernel: tpu_custom_call.1
$region0: #{tpu_custom_call.1}
  #allocation0 [shape = 'u32[]', space=smem, size = 0x4, offset = 0x4, fixed_abs, tag = 'smem constant byte address 0x4 - core index']
  #allocation1 [shape = 'u32[144,128]{1,0:T(1,128)}', space=vmem, size = 0x12000, scoped, tag = 'internal scratch']
  %s0 = inlined_call_operand.hbm [shape: f32[8,64], index: 0, kind: input, shape index: {}]
  %s1 = inlined_call_operand.hbm [shape: f32[64,128], index: 1, kind: input, shape index: {}]
  %s2 = inlined_call_operand.vmem [shape: f32[1,128], index: 2, kind: input, shape index: {}]
  %s3 = inlined_call_operand.hbm [shape: f32[128,128], index: 3, kind: input, shape index: {}]
  %s4 = inlined_call_operand.vmem [shape: f32[1,128], index: 4, kind: input, shape index: {}]
  %s5 = inlined_call_operand.hbm [shape: f32[128,128], index: 5, kind: input, shape index: {}]
  %s6 = inlined_call_operand.vmem [shape: f32[1,128], index: 6, kind: input, shape index: {}]
  %s7 = inlined_call_operand.hbm [shape: f32[8,128], index: 7, kind: output, shape index: {0}]
  %s8 = inlined_call_operand.hbm [shape: f32[8,128], index: 8, kind: output, shape index: {1}]
  %9 = xla_tuple %s7, %s8
  %s10 = sld [smem:[#allocation0]]
  $region62: #{tpu_custom_call.1} parent=0
    _
  %s12 = ssub.s32 1, %s10
  %s13 = scalar_select 0, %s12, %s10
  $region1: #{tpu_custom_call.1} parent=0
    #allocation2 [shape = 'u8[4096]{0}', space=vmem, size = 0x1000, scoped, tag = 'input window, operand 0, single buffered']
    #allocation3 [shape = 's32[1]{0}', space=sflag, size = 0x4, scoped, tag = 'scoped memory for tpu_custom_call.1']
    #allocation4 [shape = 's32[1]{0}', space=sflag, size = 0x4, scoped, tag = 'scoped memory for tpu_custom_call.1']
    #allocation5 [shape = 'u8[32768]{0}', space=vmem, size = 0x8000, scoped, tag = 'input window, operand 1, single buffered']
    #allocation6 [shape = 's32[1]{0}', space=sflag, size = 0x4, scoped, tag = 'scoped memory for tpu_custom_call.1']
    #allocation7 [shape = 'u8[65536]{0}', space=vmem, size = 0x10000, scoped, tag = 'input window, operand 3, single buffered']
    #allocation8 [shape = 'u8[65536]{0}', space=vmem, size = 0x10000, scoped, tag = 'input window, operand 5, single buffered']
    #allocation9 [shape = 's32[1]{0}', space=sflag, size = 0x4, scoped, tag = 'scoped memory for tpu_custom_call.1']
    #allocation10 [shape = 'u8[4096]{0}', space=vmem, size = 0x1000, scoped, tag = 'output window, operand 0, single buffered']
    #allocation11 [shape = 'u8[4096]{0}', space=vmem, size = 0x1000, scoped, tag = 'output window, operand 1, single buffered']
    #allocation12 [shape = 's32[1]{0}', space=sflag, size = 0x4, scoped, tag = 'scoped memory for tpu_custom_call.1']
    %14 = vsyncpa [#allocation3], 0
    %15 = vsyncpa [#allocation6], 0
    %16 = vsyncpa [#allocation9], 0
    %17 = vsyncpa [#allocation4], 0
    %18 = vsyncpa [#allocation12], 0
    // Predicated region
    $region2: #{tpu_custom_call.1} parent=1 // pred_check
      _
    $region3: #{tpu_custom_call.1} parent=1 // pred_check_branch
      %20 = sbr.rel (0) target = $region5
    $region4: #{tpu_custom_call.1} parent=1 // pred_region
      %s22 = ssub.s32 128, 128
      %23 = vsyncadd [#allocation3], %s22
      %s25 = sshll.u32 [#allocation2], 4
      %s26 = int_to_ptr.vmem [resolvable:$true] %s25
      %28 = dma.hbm_to_vmem [thread:$0]  %s0, 128, %s26, [#allocation3]
    $region5: #{tpu_custom_call.1} parent=1 // pred_fallthru
      _
    // Predicated region
    $region6: #{tpu_custom_call.1} parent=1 // pred_check
      _
    $region7: #{tpu_custom_call.1} parent=1 // pred_check_branch
      %30 = sbr.rel (0) target = $region9
    $region8: #{tpu_custom_call.1} parent=1 // pred_region
      %s32 = ssub.s32 1024, 1024
      %33 = vsyncadd [#allocation6], %s32
      %s34 = sshll.u32 [#allocation5], 4
      %s35 = int_to_ptr.vmem [resolvable:$true] %s34
      %40 = dma.hbm_to_vmem [thread:$0]  %s1, 1024, %s35, [#allocation6], 128, 128, 8
    $region9: #{tpu_custom_call.1} parent=1 // pred_fallthru
      _
    // Predicated region
    $region10: #{tpu_custom_call.1} parent=1 // pred_check
      _
    $region11: #{tpu_custom_call.1} parent=1 // pred_check_branch
      %42 = sbr.rel (0) target = $region13
    $region12: #{tpu_custom_call.1} parent=1 // pred_region
      _
    $region13: #{tpu_custom_call.1} parent=1 // pred_fallthru
      _
    // Predicated region
    $region14: #{tpu_custom_call.1} parent=1 // pred_check
      _
    $region15: #{tpu_custom_call.1} parent=1 // pred_check_branch
      %44 = sbr.rel (0) target = $region17
    $region16: #{tpu_custom_call.1} parent=1 // pred_region
      %s46 = ssub.s32 2048, 2048
      %47 = vsyncadd [#allocation6], %s46
      %s48 = sshll.u32 [#allocation7], 4
      %s49 = int_to_ptr.vmem [resolvable:$true] %s48
      %54 = dma.hbm_to_vmem [thread:$0]  %s3, 2048, %s49, [#allocation6], 128, 128, 8
    $region17: #{tpu_custom_call.1} parent=1 // pred_fallthru
      _
    // Predicated region
    $region18: #{tpu_custom_call.1} parent=1 // pred_check
      _
    $region19: #{tpu_custom_call.1} parent=1 // pred_check_branch
      %56 = sbr.rel (0) target = $region21
    $region20: #{tpu_custom_call.1} parent=1 // pred_region
      _
    $region21: #{tpu_custom_call.1} parent=1 // pred_fallthru
      _
    // Predicated region
    $region22: #{tpu_custom_call.1} parent=1 // pred_check
      _
    $region23: #{tpu_custom_call.1} parent=1 // pred_check_branch
      %58 = sbr.rel (0) target = $region25
    $region24: #{tpu_custom_call.1} parent=1 // pred_region
      %s60 = ssub.s32 2048, 2048
      %61 = vsyncadd [#allocation9], %s60
      %s62 = sshll.u32 [#allocation8], 4
      %s63 = int_to_ptr.vmem [resolvable:$true] %s62
      %68 = dma.hbm_to_vmem [thread:$0]  %s5, 2048, %s63, [#allocation9], 128, 128, 8
    $region25: #{tpu_custom_call.1} parent=1 // pred_fallthru
      _
    // Predicated region
    $region26: #{tpu_custom_call.1} parent=1 // pred_check
      _
    $region27: #{tpu_custom_call.1} parent=1 // pred_check_branch
      %70 = sbr.rel (0) target = $region29
    $region28: #{tpu_custom_call.1} parent=1 // pred_region
      _
    $region29: #{tpu_custom_call.1} parent=1 // pred_fallthru
      _
    // Predicated region
    $region30: #{tpu_custom_call.1} parent=1 // pred_check
      _
    $region31: #{tpu_custom_call.1} parent=1 // pred_check_branch
      %72 = sbr.rel (0) target = $region33
    $region32: #{tpu_custom_call.1} parent=1 // pred_region
      %73 = dma.done [#allocation3], 128
    $region33: #{tpu_custom_call.1} parent=1 // pred_fallthru
      _
    // Predicated region
    $region34: #{tpu_custom_call.1} parent=1 // pred_check
      _
    $region35: #{tpu_custom_call.1} parent=1 // pred_check_branch
      %75 = sbr.rel (0) target = $region37
    $region36: #{tpu_custom_call.1} parent=1 // pred_region
      %76 = dma.done [#allocation6], 1024
    $region37: #{tpu_custom_call.1} parent=1 // pred_fallthru
      _
    // Predicated region
    $region38: #{tpu_custom_call.1} parent=1 // pred_check
      _
    $region39: #{tpu_custom_call.1} parent=1 // pred_check_branch
      %78 = sbr.rel (0) target = $region41
    $region40: #{tpu_custom_call.1} parent=1 // pred_region
      %79 = dma.done [#allocation6], 2048
    $region41: #{tpu_custom_call.1} parent=1 // pred_fallthru
      _
    // Predicated region
    $region42: #{tpu_custom_call.1} parent=1 // pred_check
      _
    $region43: #{tpu_custom_call.1} parent=1 // pred_check_branch
      %81 = sbr.rel (0) target = $region45
    $region44: #{tpu_custom_call.1} parent=1 // pred_region
      %82 = dma.done [#allocation9], 2048
    $region45: #{tpu_custom_call.1} parent=1 // pred_fallthru
      _
    %v83 = vld [vmem:[#allocation2] sm:$0xff]
    %v84 = vld [vmem:[#allocation5] sm:$0xff]
    %v85 = vld [vmem:[#allocation5 + $0x8] sm:$0xff]
    %v86 = vld [vmem:[#allocation5 + $0x10] sm:$0xff]
    %v87 = vld [vmem:[#allocation5 + $0x18] sm:$0xff]
    %v88 = vld [vmem:[#allocation5 + $0x20] sm:$0xff]
    %v89 = vld [vmem:[#allocation5 + $0x28] sm:$0xff]
    %v90 = vld [vmem:[#allocation5 + $0x30] sm:$0xff]
    %v91 = vld [vmem:[#allocation5 + $0x38] sm:$0xff]
    %v92 = vld [vmem:[%s2] sm:$0x1]
    %v94 = vlaneseq
    %v95 = vshrl.u32 %v94, 7
    %v96 = vsub.s32 0, %v95
    %v97 = vrot.slane %v92, %v96
    %vm99 = vcmask 523264
    %v101 = vsel %vm99, %v83, 0
    %103 = vmatprep.subr.mxu0 0.0
    %104 = vmatpush1.msra.mxu0 %v84
    %105 = vmatprep.subr.mxu0 0.0
    %106 = vmatpush1.msra.mxu0 %v85
    %107 = vmatprep.subr.mxu0 0.0
    %108 = vmatpush1.msra.mxu0 %v86
    %109 = vmatprep.subr.mxu0 0.0
    %110 = vmatpush1.msra.mxu0 %v87
    %111 = vmatprep.subr.mxu0 0.0
    %112 = vmatpush1.msra.mxu0 %v88
    %113 = vmatprep.subr.mxu0 0.0
    %114 = vmatpush1.msra.mxu0 %v89
    %115 = vmatprep.subr.mxu0 0.0
    %116 = vmatpush1.msra.mxu0 %v90
    %117 = vmatprep.subr.mxu0 0.0
    %118 = vmatpush1.msra.mxu0 %v91
    %119 = vmatprep.subr.mxu0 0.0
    %120 = vmatpush1.msra.mxu0 0.0
    %121 = vmatprep.subr.mxu0 0.0
    %122 = vmatpush1.msra.mxu0 0.0
    %123 = vmatprep.subr.mxu0 0.0
    %124 = vmatpush1.msra.mxu0 0.0
    %125 = vmatprep.subr.mxu0 0.0
    %126 = vmatpush1.msra.mxu0 0.0
    %127 = vmatprep.subr.mxu0 0.0
    %128 = vmatpush1.msra.mxu0 0.0
    %129 = vmatprep.subr.mxu0 0.0
    %130 = vmatpush1.msra.mxu0 0.0
    %131 = vmatprep.subr.mxu0 0.0
    %132 = vmatpush1.msra.mxu0 0.0
    %133 = vmatprep.subr.mxu0 0.0
    %134 = vmatpush1.msra.mxu0 0.0
    %135 = vmatprep.subr.mxu0 0.0
    %136 = vmatpush1.msra.mxu0 0.0
    %137 = vmatprep.subr.mxu0 0.0
    %138 = vmatpush1.msra.mxu0 0.0
    %139 = vmatprep.subr.mxu0 0.0
    %140 = vmatpush1.msra.mxu0 0.0
    %141 = vmatprep.subr.mxu0 0.0
    %142 = vmatpush1.msra.mxu0 0.0
    %143 = vmatprep.subr.mxu0 0.0
    %144 = vmatpush1.msra.mxu0 0.0
    %145 = vmatprep.subr.mxu0 0.0
    %146 = vmatpush1.msra.mxu0 0.0
    %147 = vmatprep.subr.mxu0 0.0
    %148 = vmatpush1.msra.mxu0 0.0
    %149 = vmatprep.subr.mxu0 0.0
    %150 = vmatpush1.msra.mxu0 0.0
    %151 = vmatprep.subr.mxu0 0.0
    %152 = vmatpush1.msra.mxu0 0.0
    %153 = vmatprep.subr.mxu0 0.0
    %154 = vmatpush1.msra.mxu0 0.0
    %155 = vmatprep.subr.mxu0 0.0
    %156 = vmatpush1.msra.mxu0 0.0
    %157 = vmatprep.subr.mxu0 0.0
    %158 = vmatpush1.msra.mxu0 0.0
    %159 = vmatprep.subr.mxu0 0.0
    %160 = vmatpush1.msra.mxu0 0.0
    %161 = vmatprep.subr.mxu0 0.0
    %162 = vmatpush1.msra.mxu0 0.0
    %163 = vmatprep.subr.mxu0 0.0
    %164 = vmatpush1.msra.mxu0 0.0
    %165 = vmatprep.subr.mxu0 0.0
    %166 = vmatpush1.msra.mxu0 0.0
    %167 = vmatprep.mubr.f32.mxu0 0.0
    %168 = vmatmul.mubr.f32.gmra.mrb[0].mxu0 %v101
    %v169 = vpop.f32.mrb[0].mxu0
    %v170 = vadd.f32 %v97, %v169
    %v171 = vpop.f32.mrb[0].mxu0
    %172 = vdwg.mxu0
    %v173 = vmax.f32 %v170, 0.0
    %v174 = vld [vmem:[#allocation7] sm:$0xff]
    %v175 = vld [vmem:[#allocation7 + $0x8] sm:$0xff]
    %v176 = vld [vmem:[#allocation7 + $0x10] sm:$0xff]
    %v177 = vld [vmem:[#allocation7 + $0x18] sm:$0xff]
    %v178 = vld [vmem:[#allocation7 + $0x20] sm:$0xff]
    %v179 = vld [vmem:[#allocation7 + $0x28] sm:$0xff]
    %v180 = vld [vmem:[#allocation7 + $0x30] sm:$0xff]
    %v181 = vld [vmem:[#allocation7 + $0x38] sm:$0xff]
    %v182 = vld [vmem:[#allocation7 + $0x40] sm:$0xff]
    %v183 = vld [vmem:[#allocation7 + $0x48] sm:$0xff]
    %v184 = vld [vmem:[#allocation7 + $0x50] sm:$0xff]
    %v185 = vld [vmem:[#allocation7 + $0x58] sm:$0xff]
    %v186 = vld [vmem:[#allocation7 + $0x60] sm:$0xff]
    %v187 = vld [vmem:[#allocation7 + $0x68] sm:$0xff]
    %v188 = vld [vmem:[#allocation7 + $0x70] sm:$0xff]
    %v189 = vld [vmem:[#allocation7 + $0x78] sm:$0xff]
    %v190 = vld [vmem:[%s4] sm:$0x1]
    %v192 = vlaneseq
    %v193 = vshrl.u32 %v192, 7
    %v194 = vsub.s32 0, %v193
    %v195 = vrot.slane %v190, %v194
    %197 = vmatprep.subr.mxu0 0.0
    %198 = vmatpush1.msra.mxu0 %v174
    %199 = vmatprep.subr.mxu0 0.0
    %200 = vmatpush1.msra.mxu0 %v175
    %201 = vmatprep.subr.mxu0 0.0
    %202 = vmatpush1.msra.mxu0 %v176
    %203 = vmatprep.subr.mxu0 0.0
    %204 = vmatpush1.msra.mxu0 %v177
    %205 = vmatprep.subr.mxu0 0.0
    %206 = vmatpush1.msra.mxu0 %v178
    %207 = vmatprep.subr.mxu0 0.0
    %208 = vmatpush1.msra.mxu0 %v179
    %209 = vmatprep.subr.mxu0 0.0
    %210 = vmatpush1.msra.mxu0 %v180
    %211 = vmatprep.subr.mxu0 0.0
    %212 = vmatpush1.msra.mxu0 %v181
    %213 = vmatprep.subr.mxu0 0.0
    %214 = vmatpush1.msra.mxu0 %v182
    %215 = vmatprep.subr.mxu0 0.0
    %216 = vmatpush1.msra.mxu0 %v183
    %217 = vmatprep.subr.mxu0 0.0
    %218 = vmatpush1.msra.mxu0 %v184
    %219 = vmatprep.subr.mxu0 0.0
    %220 = vmatpush1.msra.mxu0 %v185
    %221 = vmatprep.subr.mxu0 0.0
    %222 = vmatpush1.msra.mxu0 %v186
    %223 = vmatprep.subr.mxu0 0.0
    %224 = vmatpush1.msra.mxu0 %v187
    %225 = vmatprep.subr.mxu0 0.0
    %226 = vmatpush1.msra.mxu0 %v188
    %227 = vmatprep.subr.mxu0 0.0
    %228 = vmatpush1.msra.mxu0 %v189
    %229 = vmatprep.subr.mxu0 0.0
    %230 = vmatpush1.msra.mxu0 0.0
    %231 = vmatprep.subr.mxu0 0.0
    %232 = vmatpush1.msra.mxu0 0.0
    %233 = vmatprep.subr.mxu0 0.0
    %234 = vmatpush1.msra.mxu0 0.0
    %235 = vmatprep.subr.mxu0 0.0
    %236 = vmatpush1.msra.mxu0 0.0
    %237 = vmatprep.subr.mxu0 0.0
    %238 = vmatpush1.msra.mxu0 0.0
    %239 = vmatprep.subr.mxu0 0.0
    %240 = vmatpush1.msra.mxu0 0.0
    %241 = vmatprep.subr.mxu0 0.0
    %242 = vmatpush1.msra.mxu0 0.0
    %243 = vmatprep.subr.mxu0 0.0
    %244 = vmatpush1.msra.mxu0 0.0
    %245 = vmatprep.subr.mxu0 0.0
    %246 = vmatpush1.msra.mxu0 0.0
    %247 = vmatprep.subr.mxu0 0.0
    %248 = vmatpush1.msra.mxu0 0.0
    %249 = vmatprep.subr.mxu0 0.0
    %250 = vmatpush1.msra.mxu0 0.0
    %251 = vmatprep.subr.mxu0 0.0
    %252 = vmatpush1.msra.mxu0 0.0
    %253 = vmatprep.subr.mxu0 0.0
    %254 = vmatpush1.msra.mxu0 0.0
    %255 = vmatprep.subr.mxu0 0.0
    %256 = vmatpush1.msra.mxu0 0.0
    %257 = vmatprep.subr.mxu0 0.0
    %258 = vmatpush1.msra.mxu0 0.0
    %259 = vmatprep.subr.mxu0 0.0
    %260 = vmatpush1.msra.mxu0 0.0
    %261 = vmatprep.mubr.f32.mxu0 0.0
    %262 = vmatmul.mubr.f32.gmra.mrb[0].mxu0 %v173
    %v263 = vpop.f32.mrb[0].mxu0
    %v264 = vadd.f32 %v195, %v263
    %v265 = vpop.f32.mrb[0].mxu0
    %266 = vdwg.mxu0
    %v267 = vmax.f32 %v264, 0.0
    %268 = vst [vmem:[#allocation10] sm:$0xff] %v267
    %v269 = vld [vmem:[#allocation8] sm:$0xff]
    %v270 = vld [vmem:[#allocation8 + $0x8] sm:$0xff]
    %v271 = vld [vmem:[#allocation8 + $0x10] sm:$0xff]
    %v272 = vld [vmem:[#allocation8 + $0x18] sm:$0xff]
    %v273 = vld [vmem:[#allocation8 + $0x20] sm:$0xff]
    %v274 = vld [vmem:[#allocation8 + $0x28] sm:$0xff]
    %v275 = vld [vmem:[#allocation8 + $0x30] sm:$0xff]
    %v276 = vld [vmem:[#allocation8 + $0x38] sm:$0xff]
    %v277 = vld [vmem:[#allocation8 + $0x40] sm:$0xff]
    %v278 = vld [vmem:[#allocation8 + $0x48] sm:$0xff]
    %v279 = vld [vmem:[#allocation8 + $0x50] sm:$0xff]
    %v280 = vld [vmem:[#allocation8 + $0x58] sm:$0xff]
    %v281 = vld [vmem:[#allocation8 + $0x60] sm:$0xff]
    %v282 = vld [vmem:[#allocation8 + $0x68] sm:$0xff]
    %v283 = vld [vmem:[#allocation8 + $0x70] sm:$0xff]
    %v284 = vld [vmem:[#allocation8 + $0x78] sm:$0xff]
    %v285 = vld [vmem:[%s6] sm:$0x1]
    %v287 = vlaneseq
    %v288 = vshrl.u32 %v287, 7
    %v289 = vsub.s32 0, %v288
    %v290 = vrot.slane %v285, %v289
    %292 = vmatprep.subr.mxu0 0.0
    %293 = vmatpush1.msra.mxu0 %v269
    %294 = vmatprep.subr.mxu0 0.0
    %295 = vmatpush1.msra.mxu0 %v270
    %296 = vmatprep.subr.mxu0 0.0
    %297 = vmatpush1.msra.mxu0 %v271
    %298 = vmatprep.subr.mxu0 0.0
    %299 = vmatpush1.msra.mxu0 %v272
    %300 = vmatprep.subr.mxu0 0.0
    %301 = vmatpush1.msra.mxu0 %v273
    %302 = vmatprep.subr.mxu0 0.0
    %303 = vmatpush1.msra.mxu0 %v274
    %304 = vmatprep.subr.mxu0 0.0
    %305 = vmatpush1.msra.mxu0 %v275
    %306 = vmatprep.subr.mxu0 0.0
    %307 = vmatpush1.msra.mxu0 %v276
    %308 = vmatprep.subr.mxu0 0.0
    %309 = vmatpush1.msra.mxu0 %v277
    %310 = vmatprep.subr.mxu0 0.0
    %311 = vmatpush1.msra.mxu0 %v278
    %312 = vmatprep.subr.mxu0 0.0
    %313 = vmatpush1.msra.mxu0 %v279
    %314 = vmatprep.subr.mxu0 0.0
    %315 = vmatpush1.msra.mxu0 %v280
    %316 = vmatprep.subr.mxu0 0.0
    %317 = vmatpush1.msra.mxu0 %v281
    %318 = vmatprep.subr.mxu0 0.0
    %319 = vmatpush1.msra.mxu0 %v282
    %320 = vmatprep.subr.mxu0 0.0
    %321 = vmatpush1.msra.mxu0 %v283
    %322 = vmatprep.subr.mxu0 0.0
    %323 = vmatpush1.msra.mxu0 %v284
    %324 = vmatprep.subr.mxu0 0.0
    %325 = vmatpush1.msra.mxu0 0.0
    %326 = vmatprep.subr.mxu0 0.0
    %327 = vmatpush1.msra.mxu0 0.0
    %328 = vmatprep.subr.mxu0 0.0
    %329 = vmatpush1.msra.mxu0 0.0
    %330 = vmatprep.subr.mxu0 0.0
    %331 = vmatpush1.msra.mxu0 0.0
    %332 = vmatprep.subr.mxu0 0.0
    %333 = vmatpush1.msra.mxu0 0.0
    %334 = vmatprep.subr.mxu0 0.0
    %335 = vmatpush1.msra.mxu0 0.0
    %336 = vmatprep.subr.mxu0 0.0
    %337 = vmatpush1.msra.mxu0 0.0
    %338 = vmatprep.subr.mxu0 0.0
    %339 = vmatpush1.msra.mxu0 0.0
    %340 = vmatprep.subr.mxu0 0.0
    %341 = vmatpush1.msra.mxu0 0.0
    %342 = vmatprep.subr.mxu0 0.0
    %343 = vmatpush1.msra.mxu0 0.0
    %344 = vmatprep.subr.mxu0 0.0
    %345 = vmatpush1.msra.mxu0 0.0
    %346 = vmatprep.subr.mxu0 0.0
    %347 = vmatpush1.msra.mxu0 0.0
    %348 = vmatprep.subr.mxu0 0.0
    %349 = vmatpush1.msra.mxu0 0.0
    %350 = vmatprep.subr.mxu0 0.0
    %351 = vmatpush1.msra.mxu0 0.0
    %352 = vmatprep.subr.mxu0 0.0
    %353 = vmatpush1.msra.mxu0 0.0
    %354 = vmatprep.subr.mxu0 0.0
    %355 = vmatpush1.msra.mxu0 0.0
    %356 = vmatprep.mubr.f32.mxu0 0.0
    %357 = vmatmul.mubr.f32.gmra.mrb[0].mxu0 %v267
    %v358 = vpop.f32.mrb[0].mxu0
    %v359 = vadd.f32 %v290, %v358
    %v360 = vpop.f32.mrb[0].mxu0
    %361 = vdwg.mxu0
    %362 = vst [vmem:[#allocation11] sm:$0xff] %v359
    // Predicated region
    $region46: #{tpu_custom_call.1} parent=1 // pred_check
      _
    $region47: #{tpu_custom_call.1} parent=1 // pred_check_branch
      %364 = sbr.rel (0) target = $region49
    $region48: #{tpu_custom_call.1} parent=1 // pred_region
      %s366 = ssub.s32 128, 128
      %367 = vsyncadd [#allocation4], %s366
      %s369 = sshll.u32 [#allocation10], 4
      %s370 = int_to_ptr.vmem [resolvable:$true] %s369
      %372 = dma.vmem_to_hbm [thread:$0]  %s370, 128, %s7, [#allocation4]
    $region49: #{tpu_custom_call.1} parent=1 // pred_fallthru
      _
    // Predicated region
    $region50: #{tpu_custom_call.1} parent=1 // pred_check
      _
    $region51: #{tpu_custom_call.1} parent=1 // pred_check_branch
      %374 = sbr.rel (0) target = $region53
    $region52: #{tpu_custom_call.1} parent=1 // pred_region
      %s376 = ssub.s32 128, 128
      %377 = vsyncadd [#allocation12], %s376
      %s379 = sshll.u32 [#allocation11], 4
      %s380 = int_to_ptr.vmem [resolvable:$true] %s379
      %382 = dma.vmem_to_hbm [thread:$0]  %s380, 128, %s8, [#allocation12]
    $region53: #{tpu_custom_call.1} parent=1 // pred_fallthru
      _
    // Predicated region
    $region54: #{tpu_custom_call.1} parent=1 // pred_check
      _
    $region55: #{tpu_custom_call.1} parent=1 // pred_check_branch
      %384 = sbr.rel (0) target = $region57
    $region56: #{tpu_custom_call.1} parent=1 // pred_region
      %385 = dma.done [#allocation4], 128
    $region57: #{tpu_custom_call.1} parent=1 // pred_fallthru
      _
    // Predicated region
    $region58: #{tpu_custom_call.1} parent=1 // pred_check
      _
    $region59: #{tpu_custom_call.1} parent=1 // pred_check_branch
      %387 = sbr.rel (0) target = $region61
    $region60: #{tpu_custom_call.1} parent=1 // pred_region
      %388 = dma.done [#allocation12], 128
    $region61: #{tpu_custom_call.1} parent=1 // pred_fallthru
      _
    %389 = vsyncpa [#allocation3], 1
    %390 = vsyncpa [#allocation6], 1
    %391 = vsyncpa [#allocation9], 1
    %392 = vsyncpa [#allocation4], 1
    %393 = vsyncpa [#allocation12], 1

// kernel: tpu_custom_call.1
$region0: #{tpu_custom_call.1}
  #allocation0 [shape = 'u32[]', space=smem, size = 0x4, offset = 0x4, fixed_abs, tag = 'smem constant byte address 0x4 - core index']
  #allocation1 [shape = 'u32[144,128]{1,0:T(1,128)}', space=vmem, size = 0x12000, scoped, tag = 'internal scratch']
  %s0 = inlined_call_operand.hbm [shape: f32[8,64], index: 0, kind: input, shape index: {}]
  %s1 = inlined_call_operand.hbm [shape: f32[64,128], index: 1, kind: input, shape index: {}]
  %s2 = inlined_call_operand.vmem [shape: f32[1,128], index: 2, kind: input, shape index: {}]
  %s3 = inlined_call_operand.hbm [shape: f32[128,128], index: 3, kind: input, shape index: {}]
  %s4 = inlined_call_operand.vmem [shape: f32[1,128], index: 4, kind: input, shape index: {}]
  %s5 = inlined_call_operand.hbm [shape: f32[128,128], index: 5, kind: input, shape index: {}]
  %s6 = inlined_call_operand.vmem [shape: f32[1,128], index: 6, kind: input, shape index: {}]
  %s7 = inlined_call_operand.hbm [shape: f32[8,128], index: 7, kind: output, shape index: {0}]
  %s8 = inlined_call_operand.hbm [shape: f32[8,128], index: 8, kind: output, shape index: {1}]
  %9 = xla_tuple %s7, %s8
  %s10 = sld [smem:[#allocation0]]
  $region62: #{tpu_custom_call.1} parent=0
    _
  %s12 = ssub.s32 1, %s10
  %s13 = scalar_select 0, %s12, %s10
  $region1: #{tpu_custom_call.1} parent=0
    #allocation2 [shape = 'u8[4096]{0}', space=vmem, size = 0x1000, scoped, tag = 'input window, operand 0, single buffered']
    #allocation3 [shape = 's32[1]{0}', space=sflag, size = 0x4, scoped, tag = 'scoped memory for tpu_custom_call.1']
    #allocation4 [shape = 's32[1]{0}', space=sflag, size = 0x4, scoped, tag = 'scoped memory for tpu_custom_call.1']
    #allocation5 [shape = 'u8[32768]{0}', space=vmem, size = 0x8000, scoped, tag = 'input window, operand 1, single buffered']
    #allocation6 [shape = 's32[1]{0}', space=sflag, size = 0x4, scoped, tag = 'scoped memory for tpu_custom_call.1']
    #allocation7 [shape = 'u8[65536]{0}', space=vmem, size = 0x10000, scoped, tag = 'input window, operand 3, single buffered']
    #allocation8 [shape = 'u8[65536]{0}', space=vmem, size = 0x10000, scoped, tag = 'input window, operand 5, single buffered']
    #allocation9 [shape = 's32[1]{0}', space=sflag, size = 0x4, scoped, tag = 'scoped memory for tpu_custom_call.1']
    #allocation10 [shape = 'u8[4096]{0}', space=vmem, size = 0x1000, scoped, tag = 'output window, operand 0, single buffered']
    #allocation11 [shape = 'u8[4096]{0}', space=vmem, size = 0x1000, scoped, tag = 'output window, operand 1, single buffered']
    #allocation12 [shape = 's32[1]{0}', space=sflag, size = 0x4, scoped, tag = 'scoped memory for tpu_custom_call.1']
    %14 = vsyncpa [#allocation3], 0
    %15 = vsyncpa [#allocation6], 0
    %16 = vsyncpa [#allocation9], 0
    %17 = vsyncpa [#allocation4], 0
    %18 = vsyncpa [#allocation12], 0
    // Predicated region
    $region2: #{tpu_custom_call.1} parent=1 // pred_check
      _
    $region3: #{tpu_custom_call.1} parent=1 // pred_check_branch
      %20 = sbr.rel (0) target = $region5
    $region4: #{tpu_custom_call.1} parent=1 // pred_region
      %s22 = ssub.s32 128, 128
      %23 = vsyncadd [#allocation3], %s22
      %s25 = sshll.u32 [#allocation2], 4
      %s26 = int_to_ptr.vmem [resolvable:$true] %s25
      %28 = dma.hbm_to_vmem [thread:$0]  %s0, 128, %s26, [#allocation3]
    $region5: #{tpu_custom_call.1} parent=1 // pred_fallthru
      _
    // Predicated region
    $region6: #{tpu_custom_call.1} parent=1 // pred_check
      _
    $region7: #{tpu_custom_call.1} parent=1 // pred_check_branch
      %30 = sbr.rel (0) target = $region9
    $region8: #{tpu_custom_call.1} parent=1 // pred_region
      %s32 = ssub.s32 1024, 1024
      %33 = vsyncadd [#allocation6], %s32
      %s34 = sshll.u32 [#allocation5], 4
      %s35 = int_to_ptr.vmem [resolvable:$true] %s34
      %40 = dma.hbm_to_vmem [thread:$0]  %s1, 1024, %s35, [#allocation6], 128, 128, 8
    $region9: #{tpu_custom_call.1} parent=1 // pred_fallthru
      _
    // Predicated region
    $region10: #{tpu_custom_call.1} parent=1 // pred_check
      _
    $region11: #{tpu_custom_call.1} parent=1 // pred_check_branch
      %42 = sbr.rel (0) target = $region13
    $region12: #{tpu_custom_call.1} parent=1 // pred_region
      _
    $region13: #{tpu_custom_call.1} parent=1 // pred_fallthru
      _
    // Predicated region
    $region14: #{tpu_custom_call.1} parent=1 // pred_check
      _
    $region15: #{tpu_custom_call.1} parent=1 // pred_check_branch
      %44 = sbr.rel (0) target = $region17
    $region16: #{tpu_custom_call.1} parent=1 // pred_region
      %s46 = ssub.s32 2048, 2048
      %47 = vsyncadd [#allocation6], %s46
      %s48 = sshll.u32 [#allocation7], 4
      %s49 = int_to_ptr.vmem [resolvable:$true] %s48
      %54 = dma.hbm_to_vmem [thread:$0]  %s3, 2048, %s49, [#allocation6], 128, 128, 8
    $region17: #{tpu_custom_call.1} parent=1 // pred_fallthru
      _
    // Predicated region
    $region18: #{tpu_custom_call.1} parent=1 // pred_check
      _
    $region19: #{tpu_custom_call.1} parent=1 // pred_check_branch
      %56 = sbr.rel (0) target = $region21
    $region20: #{tpu_custom_call.1} parent=1 // pred_region
      _
    $region21: #{tpu_custom_call.1} parent=1 // pred_fallthru
      _
    // Predicated region
    $region22: #{tpu_custom_call.1} parent=1 // pred_check
      _
    $region23: #{tpu_custom_call.1} parent=1 // pred_check_branch
      %58 = sbr.rel (0) target = $region25
    $region24: #{tpu_custom_call.1} parent=1 // pred_region
      %s60 = ssub.s32 2048, 2048
      %61 = vsyncadd [#allocation9], %s60
      %s62 = sshll.u32 [#allocation8], 4
      %s63 = int_to_ptr.vmem [resolvable:$true] %s62
      %68 = dma.hbm_to_vmem [thread:$0]  %s5, 2048, %s63, [#allocation9], 128, 128, 8
    $region25: #{tpu_custom_call.1} parent=1 // pred_fallthru
      _
    // Predicated region
    $region26: #{tpu_custom_call.1} parent=1 // pred_check
      _
    $region27: #{tpu_custom_call.1} parent=1 // pred_check_branch
      %70 = sbr.rel (0) target = $region29
    $region28: #{tpu_custom_call.1} parent=1 // pred_region
      _
    $region29: #{tpu_custom_call.1} parent=1 // pred_fallthru
      _
    // Predicated region
    $region30: #{tpu_custom_call.1} parent=1 // pred_check
      _
    $region31: #{tpu_custom_call.1} parent=1 // pred_check_branch
      %72 = sbr.rel (0) target = $region33
    $region32: #{tpu_custom_call.1} parent=1 // pred_region
      %73 = dma.done [#allocation3], 128
    $region33: #{tpu_custom_call.1} parent=1 // pred_fallthru
      _
    // Predicated region
    $region34: #{tpu_custom_call.1} parent=1 // pred_check
      _
    $region35: #{tpu_custom_call.1} parent=1 // pred_check_branch
      %75 = sbr.rel (0) target = $region37
    $region36: #{tpu_custom_call.1} parent=1 // pred_region
      %76 = dma.done [#allocation6], 1024
    $region37: #{tpu_custom_call.1} parent=1 // pred_fallthru
      _
    // Predicated region
    $region38: #{tpu_custom_call.1} parent=1 // pred_check
      _
    $region39: #{tpu_custom_call.1} parent=1 // pred_check_branch
      %78 = sbr.rel (0) target = $region41
    $region40: #{tpu_custom_call.1} parent=1 // pred_region
      %79 = dma.done [#allocation6], 2048
    $region41: #{tpu_custom_call.1} parent=1 // pred_fallthru
      _
    // Predicated region
    $region42: #{tpu_custom_call.1} parent=1 // pred_check
      _
    $region43: #{tpu_custom_call.1} parent=1 // pred_check_branch
      %81 = sbr.rel (0) target = $region45
    $region44: #{tpu_custom_call.1} parent=1 // pred_region
      %82 = dma.done [#allocation9], 2048
    $region45: #{tpu_custom_call.1} parent=1 // pred_fallthru
      _
    %v83 = vld [vmem:[#allocation2] sm:$0xff]
    %v84 = vld [vmem:[#allocation5] sm:$0xff]
    %v85 = vld [vmem:[#allocation5 + $0x8] sm:$0xff]
    %v86 = vld [vmem:[#allocation5 + $0x10] sm:$0xff]
    %v87 = vld [vmem:[#allocation5 + $0x18] sm:$0xff]
    %v88 = vld [vmem:[#allocation5 + $0x20] sm:$0xff]
    %v89 = vld [vmem:[#allocation5 + $0x28] sm:$0xff]
    %v90 = vld [vmem:[#allocation5 + $0x30] sm:$0xff]
    %v91 = vld [vmem:[#allocation5 + $0x38] sm:$0xff]
    %v92 = vld [vmem:[%s2] sm:$0x1]
    %v94 = vlaneseq
    %v95 = vshrl.u32 %v94, 7
    %v96 = vsub.s32 0, %v95
    %v97 = vrot.slane %v92, %v96
    %vm99 = vcmask 523264
    %v101 = vsel %vm99, %v83, 0
    %103 = vmatprep.subr.mxu0 0.0
    %104 = vmatpush1.msra.mxu0 %v84
    %105 = vmatprep.subr.mxu0 0.0
    %106 = vmatpush1.msra.mxu0 %v85
    %107 = vmatprep.subr.mxu0 0.0
    %108 = vmatpush1.msra.mxu0 %v86
    %109 = vmatprep.subr.mxu0 0.0
    %110 = vmatpush1.msra.mxu0 %v87
    %111 = vmatprep.subr.mxu0 0.0
    %112 = vmatpush1.msra.mxu0 %v88
    %113 = vmatprep.subr.mxu0 0.0
    %114 = vmatpush1.msra.mxu0 %v89
    %115 = vmatprep.subr.mxu0 0.0
    %116 = vmatpush1.msra.mxu0 %v90
    %117 = vmatprep.subr.mxu0 0.0
    %118 = vmatpush1.msra.mxu0 %v91
    %119 = vmatprep.subr.mxu0 0.0
    %120 = vmatpush1.msra.mxu0 0.0
    %121 = vmatprep.subr.mxu0 0.0
    %122 = vmatpush1.msra.mxu0 0.0
    %123 = vmatprep.subr.mxu0 0.0
    %124 = vmatpush1.msra.mxu0 0.0
    %125 = vmatprep.subr.mxu0 0.0
    %126 = vmatpush1.msra.mxu0 0.0
    %127 = vmatprep.subr.mxu0 0.0
    %128 = vmatpush1.msra.mxu0 0.0
    %129 = vmatprep.subr.mxu0 0.0
    %130 = vmatpush1.msra.mxu0 0.0
    %131 = vmatprep.subr.mxu0 0.0
    %132 = vmatpush1.msra.mxu0 0.0
    %133 = vmatprep.subr.mxu0 0.0
    %134 = vmatpush1.msra.mxu0 0.0
    %135 = vmatprep.subr.mxu0 0.0
    %136 = vmatpush1.msra.mxu0 0.0
    %137 = vmatprep.subr.mxu0 0.0
    %138 = vmatpush1.msra.mxu0 0.0
    %139 = vmatprep.subr.mxu0 0.0
    %140 = vmatpush1.msra.mxu0 0.0
    %141 = vmatprep.subr.mxu0 0.0
    %142 = vmatpush1.msra.mxu0 0.0
    %143 = vmatprep.subr.mxu0 0.0
    %144 = vmatpush1.msra.mxu0 0.0
    %145 = vmatprep.subr.mxu0 0.0
    %146 = vmatpush1.msra.mxu0 0.0
    %147 = vmatprep.subr.mxu0 0.0
    %148 = vmatpush1.msra.mxu0 0.0
    %149 = vmatprep.subr.mxu0 0.0
    %150 = vmatpush1.msra.mxu0 0.0
    %151 = vmatprep.subr.mxu0 0.0
    %152 = vmatpush1.msra.mxu0 0.0
    %153 = vmatprep.subr.mxu0 0.0
    %154 = vmatpush1.msra.mxu0 0.0
    %155 = vmatprep.subr.mxu0 0.0
    %156 = vmatpush1.msra.mxu0 0.0
    %157 = vmatprep.subr.mxu0 0.0
    %158 = vmatpush1.msra.mxu0 0.0
    %159 = vmatprep.subr.mxu0 0.0
    %160 = vmatpush1.msra.mxu0 0.0
    %161 = vmatprep.subr.mxu0 0.0
    %162 = vmatpush1.msra.mxu0 0.0
    %163 = vmatprep.subr.mxu0 0.0
    %164 = vmatpush1.msra.mxu0 0.0
    %165 = vmatprep.subr.mxu0 0.0
    %166 = vmatpush1.msra.mxu0 0.0
    %167 = vmatprep.mubr.f32.mxu0 0.0
    %168 = vmatmul.mubr.f32.gmra.mrb[0].mxu0 %v101
    %v169 = vpop.f32.mrb[0].mxu0
    %v170 = vadd.f32 %v97, %v169
    %v171 = vpop.f32.mrb[0].mxu0
    %172 = vdwg.mxu0
    %v173 = vmax.f32 %v170, 0.0
    %v174 = vld [vmem:[#allocation7] sm:$0xff]
    %v175 = vld [vmem:[#allocation7 + $0x8] sm:$0xff]
    %v176 = vld [vmem:[#allocation7 + $0x10] sm:$0xff]
    %v177 = vld [vmem:[#allocation7 + $0x18] sm:$0xff]
    %v178 = vld [vmem:[#allocation7 + $0x20] sm:$0xff]
    %v179 = vld [vmem:[#allocation7 + $0x28] sm:$0xff]
    %v180 = vld [vmem:[#allocation7 + $0x30] sm:$0xff]
    %v181 = vld [vmem:[#allocation7 + $0x38] sm:$0xff]
    %v182 = vld [vmem:[#allocation7 + $0x40] sm:$0xff]
    %v183 = vld [vmem:[#allocation7 + $0x48] sm:$0xff]
    %v184 = vld [vmem:[#allocation7 + $0x50] sm:$0xff]
    %v185 = vld [vmem:[#allocation7 + $0x58] sm:$0xff]
    %v186 = vld [vmem:[#allocation7 + $0x60] sm:$0xff]
    %v187 = vld [vmem:[#allocation7 + $0x68] sm:$0xff]
    %v188 = vld [vmem:[#allocation7 + $0x70] sm:$0xff]
    %v189 = vld [vmem:[#allocation7 + $0x78] sm:$0xff]
    %v190 = vld [vmem:[%s4] sm:$0x1]
    %v192 = vlaneseq
    %v193 = vshrl.u32 %v192, 7
    %v194 = vsub.s32 0, %v193
    %v195 = vrot.slane %v190, %v194
    %197 = vmatprep.subr.mxu0 0.0
    %198 = vmatpush1.msra.mxu0 %v174
    %199 = vmatprep.subr.mxu0 0.0
    %200 = vmatpush1.msra.mxu0 %v175
    %201 = vmatprep.subr.mxu0 0.0
    %202 = vmatpush1.msra.mxu0 %v176
    %203 = vmatprep.subr.mxu0 0.0
    %204 = vmatpush1.msra.mxu0 %v177
    %205 = vmatprep.subr.mxu0 0.0
    %206 = vmatpush1.msra.mxu0 %v178
    %207 = vmatprep.subr.mxu0 0.0
    %208 = vmatpush1.msra.mxu0 %v179
    %209 = vmatprep.subr.mxu0 0.0
    %210 = vmatpush1.msra.mxu0 %v180
    %211 = vmatprep.subr.mxu0 0.0
    %212 = vmatpush1.msra.mxu0 %v181
    %213 = vmatprep.subr.mxu0 0.0
    %214 = vmatpush1.msra.mxu0 %v182
    %215 = vmatprep.subr.mxu0 0.0
    %216 = vmatpush1.msra.mxu0 %v183
    %217 = vmatprep.subr.mxu0 0.0
    %218 = vmatpush1.msra.mxu0 %v184
    %219 = vmatprep.subr.mxu0 0.0
    %220 = vmatpush1.msra.mxu0 %v185
    %221 = vmatprep.subr.mxu0 0.0
    %222 = vmatpush1.msra.mxu0 %v186
    %223 = vmatprep.subr.mxu0 0.0
    %224 = vmatpush1.msra.mxu0 %v187
    %225 = vmatprep.subr.mxu0 0.0
    %226 = vmatpush1.msra.mxu0 %v188
    %227 = vmatprep.subr.mxu0 0.0
    %228 = vmatpush1.msra.mxu0 %v189
    %229 = vmatprep.subr.mxu0 0.0
    %230 = vmatpush1.msra.mxu0 0.0
    %231 = vmatprep.subr.mxu0 0.0
    %232 = vmatpush1.msra.mxu0 0.0
    %233 = vmatprep.subr.mxu0 0.0
    %234 = vmatpush1.msra.mxu0 0.0
    %235 = vmatprep.subr.mxu0 0.0
    %236 = vmatpush1.msra.mxu0 0.0
    %237 = vmatprep.subr.mxu0 0.0
    %238 = vmatpush1.msra.mxu0 0.0
    %239 = vmatprep.subr.mxu0 0.0
    %240 = vmatpush1.msra.mxu0 0.0
    %241 = vmatprep.subr.mxu0 0.0
    %242 = vmatpush1.msra.mxu0 0.0
    %243 = vmatprep.subr.mxu0 0.0
    %244 = vmatpush1.msra.mxu0 0.0
    %245 = vmatprep.subr.mxu0 0.0
    %246 = vmatpush1.msra.mxu0 0.0
    %247 = vmatprep.subr.mxu0 0.0
    %248 = vmatpush1.msra.mxu0 0.0
    %249 = vmatprep.subr.mxu0 0.0
    %250 = vmatpush1.msra.mxu0 0.0
    %251 = vmatprep.subr.mxu0 0.0
    %252 = vmatpush1.msra.mxu0 0.0
    %253 = vmatprep.subr.mxu0 0.0
    %254 = vmatpush1.msra.mxu0 0.0
    %255 = vmatprep.subr.mxu0 0.0
    %256 = vmatpush1.msra.mxu0 0.0
    %257 = vmatprep.subr.mxu0 0.0
    %258 = vmatpush1.msra.mxu0 0.0
    %259 = vmatprep.subr.mxu0 0.0
    %260 = vmatpush1.msra.mxu0 0.0
    %261 = vmatprep.mubr.f32.mxu0 0.0
    %262 = vmatmul.mubr.f32.gmra.mrb[0].mxu0 %v173
    %v263 = vpop.f32.mrb[0].mxu0
    %v264 = vadd.f32 %v195, %v263
    %v265 = vpop.f32.mrb[0].mxu0
    %266 = vdwg.mxu0
    %v267 = vmax.f32 %v264, 0.0
    %268 = vst [vmem:[#allocation10] sm:$0xff] %v267
    %v269 = vld [vmem:[#allocation8] sm:$0xff]
    %v270 = vld [vmem:[#allocation8 + $0x8] sm:$0xff]
    %v271 = vld [vmem:[#allocation8 + $0x10] sm:$0xff]
    %v272 = vld [vmem:[#allocation8 + $0x18] sm:$0xff]
    %v273 = vld [vmem:[#allocation8 + $0x20] sm:$0xff]
    %v274 = vld [vmem:[#allocation8 + $0x28] sm:$0xff]
    %v275 = vld [vmem:[#allocation8 + $0x30] sm:$0xff]
    %v276 = vld [vmem:[#allocation8 + $0x38] sm:$0xff]
    %v277 = vld [vmem:[#allocation8 + $0x40] sm:$0xff]
    %v278 = vld [vmem:[#allocation8 + $0x48] sm:$0xff]
    %v279 = vld [vmem:[#allocation8 + $0x50] sm:$0xff]
    %v280 = vld [vmem:[#allocation8 + $0x58] sm:$0xff]
    %v281 = vld [vmem:[#allocation8 + $0x60] sm:$0xff]
    %v282 = vld [vmem:[#allocation8 + $0x68] sm:$0xff]
    %v283 = vld [vmem:[#allocation8 + $0x70] sm:$0xff]
    %v284 = vld [vmem:[#allocation8 + $0x78] sm:$0xff]
    %v285 = vld [vmem:[%s6] sm:$0x1]
    %v287 = vlaneseq
    %v288 = vshrl.u32 %v287, 7
    %v289 = vsub.s32 0, %v288
    %v290 = vrot.slane %v285, %v289
    %292 = vmatprep.subr.mxu0 0.0
    %293 = vmatpush1.msra.mxu0 %v269
    %294 = vmatprep.subr.mxu0 0.0
    %295 = vmatpush1.msra.mxu0 %v270
    %296 = vmatprep.subr.mxu0 0.0
    %297 = vmatpush1.msra.mxu0 %v271
    %298 = vmatprep.subr.mxu0 0.0
    %299 = vmatpush1.msra.mxu0 %v272
    %300 = vmatprep.subr.mxu0 0.0
    %301 = vmatpush1.msra.mxu0 %v273
    %302 = vmatprep.subr.mxu0 0.0
    %303 = vmatpush1.msra.mxu0 %v274
    %304 = vmatprep.subr.mxu0 0.0
    %305 = vmatpush1.msra.mxu0 %v275
    %306 = vmatprep.subr.mxu0 0.0
    %307 = vmatpush1.msra.mxu0 %v276
    %308 = vmatprep.subr.mxu0 0.0
    %309 = vmatpush1.msra.mxu0 %v277
    %310 = vmatprep.subr.mxu0 0.0
    %311 = vmatpush1.msra.mxu0 %v278
    %312 = vmatprep.subr.mxu0 0.0
    %313 = vmatpush1.msra.mxu0 %v279
    %314 = vmatprep.subr.mxu0 0.0
    %315 = vmatpush1.msra.mxu0 %v280
    %316 = vmatprep.subr.mxu0 0.0
    %317 = vmatpush1.msra.mxu0 %v281
    %318 = vmatprep.subr.mxu0 0.0
    %319 = vmatpush1.msra.mxu0 %v282
    %320 = vmatprep.subr.mxu0 0.0
    %321 = vmatpush1.msra.mxu0 %v283
    %322 = vmatprep.subr.mxu0 0.0
    %323 = vmatpush1.msra.mxu0 %v284
    %324 = vmatprep.subr.mxu0 0.0
    %325 = vmatpush1.msra.mxu0 0.0
    %326 = vmatprep.subr.mxu0 0.0
    %327 = vmatpush1.msra.mxu0 0.0
    %328 = vmatprep.subr.mxu0 0.0
    %329 = vmatpush1.msra.mxu0 0.0
    %330 = vmatprep.subr.mxu0 0.0
    %331 = vmatpush1.msra.mxu0 0.0
    %332 = vmatprep.subr.mxu0 0.0
    %333 = vmatpush1.msra.mxu0 0.0
    %334 = vmatprep.subr.mxu0 0.0
    %335 = vmatpush1.msra.mxu0 0.0
    %336 = vmatprep.subr.mxu0 0.0
    %337 = vmatpush1.msra.mxu0 0.0
    %338 = vmatprep.subr.mxu0 0.0
    %339 = vmatpush1.msra.mxu0 0.0
    %340 = vmatprep.subr.mxu0 0.0
    %341 = vmatpush1.msra.mxu0 0.0
    %342 = vmatprep.subr.mxu0 0.0
    %343 = vmatpush1.msra.mxu0 0.0
    %344 = vmatprep.subr.mxu0 0.0
    %345 = vmatpush1.msra.mxu0 0.0
    %346 = vmatprep.subr.mxu0 0.0
    %347 = vmatpush1.msra.mxu0 0.0
    %348 = vmatprep.subr.mxu0 0.0
    %349 = vmatpush1.msra.mxu0 0.0
    %350 = vmatprep.subr.mxu0 0.0
    %351 = vmatpush1.msra.mxu0 0.0
    %352 = vmatprep.subr.mxu0 0.0
    %353 = vmatpush1.msra.mxu0 0.0
    %354 = vmatprep.subr.mxu0 0.0
    %355 = vmatpush1.msra.mxu0 0.0
    %356 = vmatprep.mubr.f32.mxu0 0.0
    %357 = vmatmul.mubr.f32.gmra.mrb[0].mxu0 %v267
    %v358 = vpop.f32.mrb[0].mxu0
    %v359 = vadd.f32 %v290, %v358
    %v360 = vpop.f32.mrb[0].mxu0
    %361 = vdwg.mxu0
    %362 = vst [vmem:[#allocation11] sm:$0xff] %v359
    // Predicated region
    $region46: #{tpu_custom_call.1} parent=1 // pred_check
      _
    $region47: #{tpu_custom_call.1} parent=1 // pred_check_branch
      %364 = sbr.rel (0) target = $region49
    $region48: #{tpu_custom_call.1} parent=1 // pred_region
      %s366 = ssub.s32 128, 128
      %367 = vsyncadd [#allocation4], %s366
      %s369 = sshll.u32 [#allocation10], 4
      %s370 = int_to_ptr.vmem [resolvable:$true] %s369
      %372 = dma.vmem_to_hbm [thread:$0]  %s370, 128, %s7, [#allocation4]
    $region49: #{tpu_custom_call.1} parent=1 // pred_fallthru
      _
    // Predicated region
    $region50: #{tpu_custom_call.1} parent=1 // pred_check
      _
    $region51: #{tpu_custom_call.1} parent=1 // pred_check_branch
      %374 = sbr.rel (0) target = $region53
    $region52: #{tpu_custom_call.1} parent=1 // pred_region
      %s376 = ssub.s32 128, 128
      %377 = vsyncadd [#allocation12], %s376
      %s379 = sshll.u32 [#allocation11], 4
      %s380 = int_to_ptr.vmem [resolvable:$true] %s379
      %382 = dma.vmem_to_hbm [thread:$0]  %s380, 128, %s8, [#allocation12]
    $region53: #{tpu_custom_call.1} parent=1 // pred_fallthru
      _
    // Predicated region
    $region54: #{tpu_custom_call.1} parent=1 // pred_check
      _
    $region55: #{tpu_custom_call.1} parent=1 // pred_check_branch
      %384 = sbr.rel (0) target = $region57
    $region56: #{tpu_custom_call.1} parent=1 // pred_region
      %385 = dma.done [#allocation4], 128
    $region57: #{tpu_custom_call.1} parent=1 // pred_fallthru
      _
    // Predicated region
    $region58: #{tpu_custom_call.1} parent=1 // pred_check
      _
    $region59: #{tpu_custom_call.1} parent=1 // pred_check_branch
      %387 = sbr.rel (0) target = $region61
    $region60: #{tpu_custom_call.1} parent=1 // pred_region
      %388 = dma.done [#allocation12], 128
    $region61: #{tpu_custom_call.1} parent=1 // pred_fallthru
      _
    %389 = vsyncpa [#allocation3], 1
    %390 = vsyncpa [#allocation6], 1
    %391 = vsyncpa [#allocation9], 1
    %392 = vsyncpa [#allocation4], 1
    %393 = vsyncpa [#allocation12], 1

</llo_original>
